<compile_context>
chip_gen: v6e
topology: v6e:2x2x1
jax: 0.10.0
libtpu: 0.0.40
codegen_flags: <defaults>
</compile_context>

<pallas_src>
import functools

import jax
import jax.numpy as jnp
from jax.experimental import pallas as pl
from jax.experimental.pallas import tpu as pltpu

HIDDEN = 64        # logical hidden size (matches nn.Linear(inputs, 64))
LANE = 128         # TPU lane width; pad hidden dim to this


def _round_up(n, m):
    return ((n + m - 1) // m) * m


def _cdiv(a, b):
    return (a + b - 1) // b


def mlp_kernel(x_ref, w1_ref, b1_ref, w2_ref, b2_ref, w3_ref, b3_ref, o_ref):
    # Cast input to bf16 in-kernel (free VPU slot); MXU matmuls accumulate in f32.
    x = x_ref[...].astype(w1_ref.dtype)
    # Layer 1: bf16 matmul on the MXU, f32 accumulate; bias add + ReLU in f32 (VPU).
    h1 = jnp.dot(x, w1_ref[...], preferred_element_type=jnp.float32)
    h1 = jnp.maximum(h1 + b1_ref[...], 0.0)
    # Layer 2
    h2 = jnp.dot(h1.astype(w2_ref.dtype), w2_ref[...],
                 preferred_element_type=jnp.float32)
    h2 = jnp.maximum(h2 + b2_ref[...], 0.0)
    # Layer 3 (no activation)
    out = jnp.dot(h2.astype(w3_ref.dtype), w3_ref[...],
                  preferred_element_type=jnp.float32) + b3_ref[...]
    o_ref[...] = out.astype(o_ref.dtype)


def init_params(key, inputs, outputs, hidden=HIDDEN):
    """PyTorch-style uniform init. Weights stored as (in, out), f32."""
    ks = jax.random.split(key, 6)

    def lin(kw, kb, fan_in, fan_out):
        bound = 1.0 / jnp.sqrt(fan_in)
        w = jax.random.uniform(kw, (fan_in, fan_out), jnp.float32, -bound, bound)
        b = jax.random.uniform(kb, (1, fan_out), jnp.float32, -bound, bound)
        return w, b

    w1, b1 = lin(ks[0], ks[1], inputs, hidden)
    w2, b2 = lin(ks[2], ks[3], hidden, hidden)
    w3, b3 = lin(ks[4], ks[5], hidden, outputs)
    return {"w1": w1, "b1": b1, "w2": w2, "b2": b2, "w3": w3, "b3": b3}


def prepare_params(params):
    """Zero-pad the hidden dim to LANE (=128) and cast weights to bf16.

    Zero padding is inert: padded weight rows contribute 0 to dots, padded
    hidden columns + zero bias stay 0 through ReLU. The output feature dim is
    NOT padded (narrow HBM writeback). Biases stay f32 (elementwise path f32).
    """
    w1, b1 = params["w1"], params["b1"]
    w2, b2 = params["w2"], params["b2"]
    w3, b3 = params["w3"], params["b3"]
    in_f = w1.shape[0]
    hid = w1.shape[1]
    out_f = w3.shape[1]
    hid_p = _round_up(hid, LANE)

    w1p = jnp.zeros((in_f, hid_p), jnp.float32).at[:, :hid].set(w1)
    b1p = jnp.zeros((1, hid_p), jnp.float32).at[:, :hid].set(b1)
    w2p = jnp.zeros((hid_p, hid_p), jnp.float32).at[:hid, :hid].set(w2)
    b2p = jnp.zeros((1, hid_p), jnp.float32).at[:, :hid].set(b2)
    w3p = jnp.zeros((hid_p, out_f), jnp.float32).at[:hid, :].set(w3)
    b3p = b3.astype(jnp.float32)

    return {
        "w1": w1p.astype(jnp.bfloat16), "b1": b1p,
        "w2": w2p.astype(jnp.bfloat16), "b2": b2p,
        "w3": w3p.astype(jnp.bfloat16), "b3": b3p,
    }


@functools.partial(jax.jit, static_argnames=("tb",))
def mlp_forward(x, pp, tb=2048):
    """x: (B, inputs) f32.  pp: prepared (hidden-padded, bf16-weight) params."""
    B, in_f = x.shape
    hid_p = pp["w1"].shape[1]
    out_f = pp["w3"].shape[1]

    # Balanced batch tiling: minimize zero-row padding, keep TB a multiple of 8.
    b8 = max(8, _round_up(B, 8))
    tb = max(8, _round_up(tb, 8))
    n_tiles = _cdiv(b8, tb)
    if b8 >= 16:
        n_tiles = max(n_tiles, 2)          # >=2 grid steps -> both v7x TCs used
    TB = _round_up(_cdiv(b8, n_tiles), 8)
    b_pad = TB * n_tiles

    xp = x
    if b_pad != B:
        xp = jnp.pad(xp, ((0, b_pad - B), (0, 0)))

    w_bytes = 2 * (in_f * hid_p + hid_p * hid_p + hid_p * out_f) + \
        4 * (hid_p + hid_p + out_f)
    cost = pl.CostEstimate(
        flops=2 * b_pad * (in_f * hid_p + hid_p * hid_p + hid_p * out_f),
        transcendentals=0,
        bytes_accessed=b_pad * in_f * 4 + b_pad * out_f * 4 + w_bytes,
    )

    out_padded = pl.pallas_call(
        mlp_kernel,
        out_shape=jax.ShapeDtypeStruct((b_pad, out_f), jnp.float32),
        grid=(n_tiles,),
        in_specs=[
            pl.BlockSpec((TB, in_f), lambda i: (i, 0)),       # x: tiled over batch
            pl.BlockSpec((in_f, hid_p), lambda i: (0, 0)),    # w1: VMEM-resident
            pl.BlockSpec((1, hid_p), lambda i: (0, 0)),       # b1
            pl.BlockSpec((hid_p, hid_p), lambda i: (0, 0)),   # w2
            pl.BlockSpec((1, hid_p), lambda i: (0, 0)),       # b2
            pl.BlockSpec((hid_p, out_f), lambda i: (0, 0)),   # w3 (narrow, unpadded)
            pl.BlockSpec((1, out_f), lambda i: (0, 0)),       # b3
        ],
        out_specs=pl.BlockSpec((TB, out_f), lambda i: (i, 0)),
        compiler_params=pltpu.CompilerParams(
            dimension_semantics=("parallel",),               # megacore on v7x
            vmem_limit_bytes=32 * 1024 * 1024,               # fits v7x's 64 MiB VMEM
        ),
        cost_estimate=cost,
    )(xp, pp["w1"], pp["b1"], pp["w2"], pp["b2"], pp["w3"], pp["b3"])

    return out_padded[:B]


def mlp_reference_matched(x, pp):
    """Same dtype strategy as the kernel (bf16 operands, f32 accum, f32 VPU)."""
    xb = x.astype(jnp.bfloat16)
    h1 = jnp.maximum(
        jnp.dot(xb, pp["w1"], preferred_element_type=jnp.float32) + pp["b1"], 0.0)
    h2 = jnp.maximum(
        jnp.dot(h1.astype(jnp.bfloat16), pp["w2"],
                preferred_element_type=jnp.float32) + pp["b2"], 0.0)
    out = jnp.dot(h2.astype(jnp.bfloat16), pp["w3"],
                  preferred_element_type=jnp.float32) + pp["b3"]
    return out


def mlp_reference_f32(x, p):
    h1 = jnp.maximum(x @ p["w1"] + p["b1"], 0.0)
    h2 = jnp.maximum(h1 @ p["w2"] + p["b2"], 0.0)
    return h2 @ p["w3"] + p["b3"]


if __name__ == "__main__":
    key = jax.random.PRNGKey(0)
    k_params, k_x = jax.random.split(key)

    batch, inputs, outputs = 8, 16, 4
    params = init_params(k_params, inputs, outputs)
    pp = prepare_params(params)
    x = jax.random.normal(k_x, (batch, inputs), jnp.float32)

    out = mlp_forward(x, pp)
    out = jax.block_until_ready(out)
    assert out.shape == (batch, outputs), out.shape

    # Bit-level strategy-matched reference (bf16 operands, f32 accumulate).
    ref_matched = mlp_reference_matched(x, pp)
    assert jnp.allclose(out, ref_matched, atol=1e-4, rtol=1e-4), "mismatch vs matched ref"

    # Full-precision reference (loose tolerance: bf16 operand rounding).
    ref_f32 = mlp_reference_f32(x, params)
    assert jnp.allclose(out, ref_f32, atol=5e-2, rtol=5e-2), "mismatch vs f32 ref"

    print("KERNEL_OK")
</pallas_src>

<mosaic_0001>
module attributes {stable_mosaic.version = 11 : i64} {
  func.func @mlp_kernel(%arg0: i32, %arg1: memref<8x16xf32, #tpu.memory_space<vmem>>, %arg2: memref<16x128xbf16, #tpu.memory_space<vmem>>, %arg3: memref<1x128xf32, #tpu.memory_space<vmem>>, %arg4: memref<128x128xbf16, #tpu.memory_space<vmem>>, %arg5: memref<1x128xf32, #tpu.memory_space<vmem>>, %arg6: memref<128x4xbf16, #tpu.memory_space<vmem>>, %arg7: memref<1x4xf32, #tpu.memory_space<vmem>>, %arg8: memref<8x4xf32, #tpu.memory_space<vmem>>) attributes {dimension_semantics = [#tpu.dimension_semantics<parallel>], iteration_bounds = array<i64: 1>, scalar_prefetch = 0 : i64, scratch_operands = 0 : i64, tpu.core_type = #tpu.core_type<tc>, window_params = [{transform_indices = @transform_0, window_bounds = array<i64: 8, 16>}, {pipeline_mode = #tpu.pipeline_mode<synchronous>, transform_indices = @transform_1, window_bounds = array<i64: 16, 128>}, {pipeline_mode = #tpu.pipeline_mode<synchronous>, transform_indices = @transform_2, window_bounds = array<i64: 1, 128>}, {pipeline_mode = #tpu.pipeline_mode<synchronous>, transform_indices = @transform_3, window_bounds = array<i64: 128, 128>}, {pipeline_mode = #tpu.pipeline_mode<synchronous>, transform_indices = @transform_4, window_bounds = array<i64: 1, 128>}, {pipeline_mode = #tpu.pipeline_mode<synchronous>, transform_indices = @transform_5, window_bounds = array<i64: 128, 4>}, {pipeline_mode = #tpu.pipeline_mode<synchronous>, transform_indices = @transform_6, window_bounds = array<i64: 1, 4>}, {transform_indices = @transform_7, window_bounds = array<i64: 8, 4>}]} {
    %c0 = arith.constant 0 : index
    %c0_0 = arith.constant 0 : index
    %0 = vector.load %arg1[%c0, %c0_0] : memref<8x16xf32, #tpu.memory_space<vmem>>, vector<8x16xf32>
    %1 = arith.truncf %0 : vector<8x16xf32> to vector<8x16xbf16>
    %c0_1 = arith.constant 0 : index
    %c0_2 = arith.constant 0 : index
    %2 = vector.load %arg2[%c0_1, %c0_2] : memref<16x128xbf16, #tpu.memory_space<vmem>>, vector<16x128xbf16>
    %cst = arith.constant dense<0.000000e+00> : vector<8x128xf32>
    %3 = tpu.matmul %1, %2, %cst {dimension_numbers = #tpu.dot_dimension_numbers<[1], [0], [0], [1], [0, 0, 1, 1], [], []>} : vector<8x16xbf16>, vector<16x128xbf16>, vector<8x128xf32> -> vector<8x128xf32>
    %c0_3 = arith.constant 0 : index
    %c0_4 = arith.constant 0 : index
    %4 = vector.load %arg3[%c0_3, %c0_4] : memref<1x128xf32, #tpu.memory_space<vmem>>, vector<1x128xf32>
    %5 = vector.broadcast %4 : vector<1x128xf32> to vector<8x128xf32>
    %6 = arith.addf %3, %5 : vector<8x128xf32>
    %cst_5 = arith.constant 0.000000e+00 : f32
    %7 = vector.broadcast %cst_5 : f32 to vector<8x128xf32>
    %8 = arith.maximumf %6, %7 : vector<8x128xf32>
    %9 = arith.truncf %8 : vector<8x128xf32> to vector<8x128xbf16>
    %c0_6 = arith.constant 0 : index
    %c0_7 = arith.constant 0 : index
    %10 = vector.load %arg4[%c0_6, %c0_7] : memref<128x128xbf16, #tpu.memory_space<vmem>>, vector<128x128xbf16>
    %cst_8 = arith.constant dense<0.000000e+00> : vector<8x128xf32>
    %11 = tpu.matmul %9, %10, %cst_8 {dimension_numbers = #tpu.dot_dimension_numbers<[1], [0], [0], [1], [0, 0, 1, 1], [], []>} : vector<8x128xbf16>, vector<128x128xbf16>, vector<8x128xf32> -> vector<8x128xf32>
    %c0_9 = arith.constant 0 : index
    %c0_10 = arith.constant 0 : index
    %12 = vector.load %arg5[%c0_9, %c0_10] : memref<1x128xf32, #tpu.memory_space<vmem>>, vector<1x128xf32>
    %13 = vector.broadcast %12 : vector<1x128xf32> to vector<8x128xf32>
    %14 = arith.addf %11, %13 : vector<8x128xf32>
    %cst_11 = arith.constant 0.000000e+00 : f32
    %15 = vector.broadcast %cst_11 : f32 to vector<8x128xf32>
    %16 = arith.maximumf %14, %15 : vector<8x128xf32>
    %17 = arith.truncf %16 : vector<8x128xf32> to vector<8x128xbf16>
    %c0_12 = arith.constant 0 : index
    %c0_13 = arith.constant 0 : index
    %18 = vector.load %arg6[%c0_12, %c0_13] : memref<128x4xbf16, #tpu.memory_space<vmem>>, vector<128x4xbf16>
    %cst_14 = arith.constant dense<0.000000e+00> : vector<8x4xf32>
    %19 = tpu.matmul %17, %18, %cst_14 {dimension_numbers = #tpu.dot_dimension_numbers<[1], [0], [0], [1], [0, 0, 1, 1], [], []>} : vector<8x128xbf16>, vector<128x4xbf16>, vector<8x4xf32> -> vector<8x4xf32>
    %c0_15 = arith.constant 0 : index
    %c0_16 = arith.constant 0 : index
    %20 = vector.load %arg7[%c0_15, %c0_16] : memref<1x4xf32, #tpu.memory_space<vmem>>, vector<1x4xf32>
    %21 = vector.broadcast %20 : vector<1x4xf32> to vector<8x4xf32>
    %22 = arith.addf %19, %21 : vector<8x4xf32>
    %c0_17 = arith.constant 0 : index
    %c0_18 = arith.constant 0 : index
    %23 = vector.load %arg8[%c0_17, %c0_18] : memref<8x4xf32, #tpu.memory_space<vmem>>, vector<8x4xf32>
    tpu.vector_store %arg8[%c0_17, %c0_18], %22 {strides = array<i32>} : memref<8x4xf32, #tpu.memory_space<vmem>>, vector<8x4xf32>,
    return
  }
  func.func @transform_0(%arg0: i32) -> (i32, i32) {
    %c0_i32 = arith.constant 0 : i32
    %c0_i32_0 = arith.constant 0 : i32
    return %arg0, %c0_i32 : i32, i32
  }
  func.func @transform_1(%arg0: i32) -> (i32, i32) {
    %c0_i32 = arith.constant 0 : i32
    %c0_i32_0 = arith.constant 0 : i32
    %c0_i32_1 = arith.constant 0 : i32
    return %c0_i32, %c0_i32_0 : i32, i32
  }
  func.func @transform_2(%arg0: i32) -> (i32, i32) {
    %c0_i32 = arith.constant 0 : i32
    %c0_i32_0 = arith.constant 0 : i32
    %c0_i32_1 = arith.constant 0 : i32
    return %c0_i32, %c0_i32_0 : i32, i32
  }
  func.func @transform_3(%arg0: i32) -> (i32, i32) {
    %c0_i32 = arith.constant 0 : i32
    %c0_i32_0 = arith.constant 0 : i32
    %c0_i32_1 = arith.constant 0 : i32
    return %c0_i32, %c0_i32_0 : i32, i32
  }
  func.func @transform_4(%arg0: i32) -> (i32, i32) {
    %c0_i32 = arith.constant 0 : i32
    %c0_i32_0 = arith.constant 0 : i32
    %c0_i32_1 = arith.constant 0 : i32
    return %c0_i32, %c0_i32_0 : i32, i32
  }
  func.func @transform_5(%arg0: i32) -> (i32, i32) {
    %c0_i32 = arith.constant 0 : i32
    %c0_i32_0 = arith.constant 0 : i32
    %c0_i32_1 = arith.constant 0 : i32
    return %c0_i32, %c0_i32_0 : i32, i32
  }
  func.func @transform_6(%arg0: i32) -> (i32, i32) {
    %c0_i32 = arith.constant 0 : i32
    %c0_i32_0 = arith.constant 0 : i32
    %c0_i32_1 = arith.constant 0 : i32
    return %c0_i32, %c0_i32_0 : i32, i32
  }
  func.func @transform_7(%arg0: i32) -> (i32, i32) {
    %c0_i32 = arith.constant 0 : i32
    %c0_i32_0 = arith.constant 0 : i32
    return %arg0, %c0_i32 : i32, i32
  }
}

</mosaic_0001>

<llo_original>
// kernel: mlp_forward.1
$region0: #{mlp_forward.1}
  #allocation0 [shape = 'u32[]', space=smem, size = 0x4, offset = 0x4, fixed_abs, tag = 'smem constant byte address 0x4 - core index']
  #allocation1 [shape = 'u32[144,128]{1,0:T(1,128)}', space=vmem, size = 0x12000, scoped, tag = 'internal scratch']
  %s0 = inlined_call_operand.vmem [shape: f32[8,16], index: 0, kind: input, shape index: {}]
  %s1 = inlined_call_operand.hbm [shape: bf16[16,128], index: 1, kind: input, shape index: {}]
  %s2 = inlined_call_operand.vmem [shape: f32[1,128], index: 2, kind: input, shape index: {}]
  %s3 = inlined_call_operand.vmem [shape: bf16[128,128], index: 3, kind: input, shape index: {}]
  %s4 = inlined_call_operand.vmem [shape: f32[1,128], index: 4, kind: input, shape index: {}]
  %s5 = inlined_call_operand.vmem [shape: bf16[128,4], index: 5, kind: input, shape index: {}]
  %s6 = inlined_call_operand.hbm [shape: f32[1,4], index: 6, kind: input, shape index: {}]
  %s7 = inlined_call_operand.vmem [shape: f32[8,4], index: 7, kind: output, shape index: {}]
  %s8 = sld [smem:[#allocation0]]
  $region46: #{mlp_forward.1} parent=0
    _
  %s10 = ssub.s32 1, %s8
  %s11 = scalar_select 0, %s10, %s8
  $region1: #{mlp_forward.1} parent=0
    #allocation2 [shape = 'u8[4096]{0}', space=vmem, size = 0x1000, scoped, tag = 'input window, operand 1, single buffered']
    #allocation3 [shape = 's32[1]{0}', space=sflag, size = 0x4, scoped, tag = 'scoped memory for mlp_forward.1']
    #allocation4 [shape = 'u8[512]{0}', space=vmem, size = 0x400, scoped, tag = 'input window, operand 6, single buffered']
    #allocation5 [shape = 's32[1]{0}', space=sflag, size = 0x4, scoped, tag = 'scoped memory for mlp_forward.1']
    %12 = vsyncpa [#allocation3], 0
    %13 = vsyncpa [#allocation5], 0
    // Predicated region
    $region2: #{mlp_forward.1} parent=1 // pred_check
      _
    $region3: #{mlp_forward.1} parent=1 // pred_check_branch
      %15 = sbr.rel (0) target = $region5
    $region4: #{mlp_forward.1} parent=1 // pred_region
      _
    $region5: #{mlp_forward.1} parent=1 // pred_fallthru
      _
    // Predicated region
    $region6: #{mlp_forward.1} parent=1 // pred_check
      _
    $region7: #{mlp_forward.1} parent=1 // pred_check_branch
      %17 = sbr.rel (0) target = $region9
    $region8: #{mlp_forward.1} parent=1 // pred_region
      %s19 = ssub.s32 128, 128
      %20 = vsyncadd [#allocation3], %s19
      %s21 = sshll.u32 [#allocation2], 4
      %s22 = int_to_ptr.vmem [resolvable:$true] %s21
      %27 = dma.hbm_to_vmem [thread:$0]  %s1, 128, %s22, [#allocation3], 64, 64, 4
    $region9: #{mlp_forward.1} parent=1 // pred_fallthru
      _
    // Predicated region
    $region10: #{mlp_forward.1} parent=1 // pred_check
      _
    $region11: #{mlp_forward.1} parent=1 // pred_check_branch
      %29 = sbr.rel (0) target = $region13
    $region12: #{mlp_forward.1} parent=1 // pred_region
      _
    $region13: #{mlp_forward.1} parent=1 // pred_fallthru
      _
    // Predicated region
    $region14: #{mlp_forward.1} parent=1 // pred_check
      _
    $region15: #{mlp_forward.1} parent=1 // pred_check_branch
      %31 = sbr.rel (0) target = $region17
    $region16: #{mlp_forward.1} parent=1 // pred_region
      _
    $region17: #{mlp_forward.1} parent=1 // pred_fallthru
      _
    // Predicated region
    $region18: #{mlp_forward.1} parent=1 // pred_check
      _
    $region19: #{mlp_forward.1} parent=1 // pred_check_branch
      %33 = sbr.rel (0) target = $region21
    $region20: #{mlp_forward.1} parent=1 // pred_region
      _
    $region21: #{mlp_forward.1} parent=1 // pred_fallthru
      _
    // Predicated region
    $region22: #{mlp_forward.1} parent=1 // pred_check
      _
    $region23: #{mlp_forward.1} parent=1 // pred_check_branch
      %35 = sbr.rel (0) target = $region25
    $region24: #{mlp_forward.1} parent=1 // pred_region
      _
    $region25: #{mlp_forward.1} parent=1 // pred_fallthru
      _
    // Predicated region
    $region26: #{mlp_forward.1} parent=1 // pred_check
      _
    $region27: #{mlp_forward.1} parent=1 // pred_check_branch
      %37 = sbr.rel (0) target = $region29
    $region28: #{mlp_forward.1} parent=1 // pred_region
      %s39 = ssub.s32 16, 16
      %40 = vsyncadd [#allocation5], %s39
      %s42 = sshll.u32 [#allocation4], 4
      %s43 = int_to_ptr.vmem [resolvable:$true] %s42
      %45 = dma.hbm_to_vmem [thread:$0]  %s6, 16, %s43, [#allocation5]
    $region29: #{mlp_forward.1} parent=1 // pred_fallthru
      _
    // Predicated region
    $region30: #{mlp_forward.1} parent=1 // pred_check
      _
    $region31: #{mlp_forward.1} parent=1 // pred_check_branch
      %47 = sbr.rel (0) target = $region33
    $region32: #{mlp_forward.1} parent=1 // pred_region
      %48 = dma.done [#allocation3], 128
    $region33: #{mlp_forward.1} parent=1 // pred_fallthru
      _
    // Predicated region
    $region34: #{mlp_forward.1} parent=1 // pred_check
      _
    $region35: #{mlp_forward.1} parent=1 // pred_check_branch
      %50 = sbr.rel (0) target = $region37
    $region36: #{mlp_forward.1} parent=1 // pred_region
      %51 = dma.done [#allocation5], 16
    $region37: #{mlp_forward.1} parent=1 // pred_fallthru
      _
    %v53 = vld [vmem:[%s0] sm:$0xff]
    %v54 = vpack.c.bf16 %v53, %v53
    %v55 = vld [vmem:[#allocation2] sm:$0xf]
    %v56 = vld [vmem:[#allocation2 + $0x4] sm:$0xf]
    %v57 = vld [vmem:[%s2] sm:$0x1]
    %v59 = vlaneseq
    %v60 = vshrl.u32 %v59, 7
    %v61 = vsub.s32 0, %v60
    %v62 = vrot.slane %v57, %v61
    %v66 = vunpack.c.l.b16 %v55
    %v67 = vunpack.c.l.b16 %v56
    %v68 = vpack.c.b16 %v67, %v66
    %vm70 = vcmask 130048
    %v72 = vsel %vm70, %v54, 0
    %74 = vmatprep.subr.bf16.mxu0 0
    %75 = vmatpush1.bf16.msra.mxu0 0
    %76 = vmatprep.subr.bf16.mxu0 0
    %77 = vmatpush1.bf16.msra.mxu0 0
    %78 = vmatprep.subr.bf16.mxu0 0
    %79 = vmatpush1.bf16.msra.mxu0 0
    %80 = vmatprep.subr.bf16.mxu0 0
    %81 = vmatpush1.bf16.msra.mxu0 0
    %82 = vmatprep.subr.bf16.mxu0 0
    %83 = vmatpush1.bf16.msra.mxu0 0
    %84 = vmatprep.subr.bf16.mxu0 0
    %85 = vmatpush1.bf16.msra.mxu0 0
    %86 = vmatprep.subr.bf16.mxu0 0
    %87 = vmatpush1.bf16.msra.mxu0 0
    %88 = vmatprep.subr.bf16.mxu0 0
    %89 = vmatpush1.bf16.msra.mxu0 %v68
    %90 = vmatprep.subr.bf16.mxu0 0
    %91 = vmatpush2.bf16.msra.mxu0 0
    %92 = vmatprep.subr.bf16.mxu0 0
    %93 = vmatpush2.bf16.msra.mxu0 0
    %94 = vmatprep.subr.bf16.mxu0 0
    %95 = vmatpush2.bf16.msra.mxu0 0
    %96 = vmatprep.subr.bf16.mxu0 0
    %97 = vmatpush2.bf16.msra.mxu0 0
    %98 = vmatprep.subr.bf16.mxu0 0
    %99 = vmatpush2.bf16.msra.mxu0 0
    %100 = vmatprep.subr.bf16.mxu0 0
    %101 = vmatpush2.bf16.msra.mxu0 0
    %102 = vmatprep.subr.bf16.mxu0 0
    %103 = vmatpush2.bf16.msra.mxu0 0
    %104 = vmatprep.subr.bf16.mxu0 0
    %105 = vmatpush2.bf16.msra.mxu0 0
    %106 = vmatprep.mubr.bf16.mxu0 0
    %107 = vmatmul.mubr.bf16.gmra.mxu0 %v72
    %v108 = vpop.f32.mrf.mxu0
    %v109 = vadd.f32 %v62, %v108
    %v110 = vpop.f32.mrf.mxu0
    %v111 = vpop.f32.mrf.mxu0
    %v112 = vpop.f32.mrf.mxu0
    %113 = vdwg.mxu0
    %v114 = vmax.f32 %v109, 0.0
    %v115 = vpack.c.bf16 %v114, %v114
    %v116 = vld [vmem:[%s3] sm:$0xf]
    %v117 = vld [vmem:[%s3 + $0x4] sm:$0xf]
    %v118 = vld [vmem:[%s3 + $0x8] sm:$0xf]
    %v119 = vld [vmem:[%s3 + $0xc] sm:$0xf]
    %v120 = vld [vmem:[%s3 + $0x10] sm:$0xf]
    %v121 = vld [vmem:[%s3 + $0x14] sm:$0xf]
    %v122 = vld [vmem:[%s3 + $0x18] sm:$0xf]
    %v123 = vld [vmem:[%s3 + $0x1c] sm:$0xf]
    %v124 = vld [vmem:[%s3 + $0x20] sm:$0xf]
    %v125 = vld [vmem:[%s3 + $0x24] sm:$0xf]
    %v126 = vld [vmem:[%s3 + $0x28] sm:$0xf]
    %v127 = vld [vmem:[%s3 + $0x2c] sm:$0xf]
    %v128 = vld [vmem:[%s3 + $0x30] sm:$0xf]
    %v129 = vld [vmem:[%s3 + $0x34] sm:$0xf]
    %v130 = vld [vmem:[%s3 + $0x38] sm:$0xf]
    %v131 = vld [vmem:[%s3 + $0x3c] sm:$0xf]
    %v132 = vld [vmem:[%s4] sm:$0x1]
    %v134 = vlaneseq
    %v135 = vshrl.u32 %v134, 7
    %v136 = vsub.s32 0, %v135
    %v137 = vrot.slane %v132, %v136
    %v155 = vunpack.c.l.b16 %v116
    %v156 = vunpack.c.l.b16 %v117
    %v157 = vunpack.c.l.b16 %v118
    %v158 = vunpack.c.l.b16 %v119
    %v159 = vunpack.c.l.b16 %v120
    %v160 = vunpack.c.l.b16 %v121
    %v161 = vunpack.c.l.b16 %v122
    %v162 = vunpack.c.l.b16 %v123
    %v163 = vunpack.c.l.b16 %v124
    %v164 = vunpack.c.l.b16 %v125
    %v165 = vunpack.c.l.b16 %v126
    %v166 = vunpack.c.l.b16 %v127
    %v167 = vunpack.c.l.b16 %v128
    %v168 = vunpack.c.l.b16 %v129
    %v169 = vunpack.c.l.b16 %v130
    %v170 = vunpack.c.l.b16 %v131
    %v171 = vpack.c.b16 %v156, %v155
    %v172 = vpack.c.b16 %v158, %v157
    %v173 = vpack.c.b16 %v160, %v159
    %v174 = vpack.c.b16 %v162, %v161
    %v175 = vpack.c.b16 %v164, %v163
    %v176 = vpack.c.b16 %v166, %v165
    %v177 = vpack.c.b16 %v168, %v167
    %v178 = vpack.c.b16 %v170, %v169
    %187 = vmatprep.subr.bf16.mxu0 0
    %188 = vmatpush1.bf16.msra.mxu0 %v178
    %189 = vmatprep.subr.bf16.mxu0 0
    %190 = vmatpush1.bf16.msra.mxu0 %v177
    %191 = vmatprep.subr.bf16.mxu0 0
    %192 = vmatpush1.bf16.msra.mxu0 %v176
    %193 = vmatprep.subr.bf16.mxu0 0
    %194 = vmatpush1.bf16.msra.mxu0 %v175
    %195 = vmatprep.subr.bf16.mxu0 0
    %196 = vmatpush1.bf16.msra.mxu0 %v174
    %197 = vmatprep.subr.bf16.mxu0 0
    %198 = vmatpush1.bf16.msra.mxu0 %v173
    %199 = vmatprep.subr.bf16.mxu0 0
    %200 = vmatpush1.bf16.msra.mxu0 %v172
    %201 = vmatprep.subr.bf16.mxu0 0
    %202 = vmatpush1.bf16.msra.mxu0 %v171
    %203 = vmatprep.subr.bf16.mxu0 0
    %204 = vmatpush2.bf16.msra.mxu0 0
    %205 = vmatprep.subr.bf16.mxu0 0
    %206 = vmatpush2.bf16.msra.mxu0 0
    %207 = vmatprep.subr.bf16.mxu0 0
    %208 = vmatpush2.bf16.msra.mxu0 0
    %209 = vmatprep.subr.bf16.mxu0 0
    %210 = vmatpush2.bf16.msra.mxu0 0
    %211 = vmatprep.subr.bf16.mxu0 0
    %212 = vmatpush2.bf16.msra.mxu0 0
    %213 = vmatprep.subr.bf16.mxu0 0
    %214 = vmatpush2.bf16.msra.mxu0 0
    %215 = vmatprep.subr.bf16.mxu0 0
    %216 = vmatpush2.bf16.msra.mxu0 0
    %217 = vmatprep.subr.bf16.mxu0 0
    %218 = vmatpush2.bf16.msra.mxu0 0
    %219 = vmatprep.mubr.bf16.mxu0 0
    %220 = vmatmul.mubr.bf16.gmra.mxu0 %v115
    %v221 = vpop.f32.mrf.mxu0
    %v222 = vadd.f32 %v137, %v221
    %v223 = vpop.f32.mrf.mxu0
    %v224 = vpop.f32.mrf.mxu0
    %v225 = vpop.f32.mrf.mxu0
    %226 = vdwg.mxu0
    %v227 = vmax.f32 %v222, 0.0
    %v228 = vpack.c.bf16 %v227, %v227
    %v229 = vld [vmem:[%s5] sm:$0xf]
    %v230 = vld [vmem:[%s5 + $0x4] sm:$0xf]
    %v231 = vld [vmem:[%s5 + $0x8] sm:$0xf]
    %v232 = vld [vmem:[%s5 + $0xc] sm:$0xf]
    %v233 = vld [vmem:[%s5 + $0x10] sm:$0xf]
    %v234 = vld [vmem:[%s5 + $0x14] sm:$0xf]
    %v235 = vld [vmem:[%s5 + $0x18] sm:$0xf]
    %v236 = vld [vmem:[%s5 + $0x1c] sm:$0xf]
    %v237 = vld [vmem:[%s5 + $0x20] sm:$0xf]
    %v238 = vld [vmem:[%s5 + $0x24] sm:$0xf]
    %v239 = vld [vmem:[%s5 + $0x28] sm:$0xf]
    %v240 = vld [vmem:[%s5 + $0x2c] sm:$0xf]
    %v241 = vld [vmem:[%s5 + $0x30] sm:$0xf]
    %v242 = vld [vmem:[%s5 + $0x34] sm:$0xf]
    %v243 = vld [vmem:[%s5 + $0x38] sm:$0xf]
    %v244 = vld [vmem:[%s5 + $0x3c] sm:$0xf]
    %v245 = vld [vmem:[#allocation4] sm:$0x1]
    %v247 = vlaneseq
    %v248 = vshrl.u32 %v247, 7
    %v249 = vsub.s32 0, %v248
    %v250 = vrot.slane %v245, %v249
    %v268 = vunpack.c.l.b16 %v229
    %v269 = vunpack.c.l.b16 %v230
    %v270 = vunpack.c.l.b16 %v231
    %v271 = vunpack.c.l.b16 %v232
    %v272 = vunpack.c.l.b16 %v233
    %v273 = vunpack.c.l.b16 %v234
    %v274 = vunpack.c.l.b16 %v235
    %v275 = vunpack.c.l.b16 %v236
    %v276 = vunpack.c.l.b16 %v237
    %v277 = vunpack.c.l.b16 %v238
    %v278 = vunpack.c.l.b16 %v239
    %v279 = vunpack.c.l.b16 %v240
    %v280 = vunpack.c.l.b16 %v241
    %v281 = vunpack.c.l.b16 %v242
    %v282 = vunpack.c.l.b16 %v243
    %v283 = vunpack.c.l.b16 %v244
    %v284 = vpack.c.b16 %v269, %v268
    %v285 = vpack.c.b16 %v271, %v270
    %v286 = vpack.c.b16 %v273, %v272
    %v287 = vpack.c.b16 %v275, %v274
    %v288 = vpack.c.b16 %v277, %v276
    %v289 = vpack.c.b16 %v279, %v278
    %v290 = vpack.c.b16 %v281, %v280
    %v291 = vpack.c.b16 %v283, %v282
    %300 = vmatprep.subr.bf16.mxu0 0
    %301 = vmatpush1.bf16.msra.mxu0 %v291
    %302 = vmatprep.subr.bf16.mxu0 0
    %303 = vmatpush1.bf16.msra.mxu0 %v290
    %304 = vmatprep.subr.bf16.mxu0 0
    %305 = vmatpush1.bf16.msra.mxu0 %v289
    %306 = vmatprep.subr.bf16.mxu0 0
    %307 = vmatpush1.bf16.msra.mxu0 %v288
    %308 = vmatprep.subr.bf16.mxu0 0
    %309 = vmatpush1.bf16.msra.mxu0 %v287
    %310 = vmatprep.subr.bf16.mxu0 0
    %311 = vmatpush1.bf16.msra.mxu0 %v286
    %312 = vmatprep.subr.bf16.mxu0 0
    %313 = vmatpush1.bf16.msra.mxu0 %v285
    %314 = vmatprep.subr.bf16.mxu0 0
    %315 = vmatpush1.bf16.msra.mxu0 %v284
    %316 = vmatprep.subr.bf16.mxu0 0
    %317 = vmatpush2.bf16.msra.mxu0 0
    %318 = vmatprep.subr.bf16.mxu0 0
    %319 = vmatpush2.bf16.msra.mxu0 0
    %320 = vmatprep.subr.bf16.mxu0 0
    %321 = vmatpush2.bf16.msra.mxu0 0
    %322 = vmatprep.subr.bf16.mxu0 0
    %323 = vmatpush2.bf16.msra.mxu0 0
    %324 = vmatprep.subr.bf16.mxu0 0
    %325 = vmatpush2.bf16.msra.mxu0 0
    %326 = vmatprep.subr.bf16.mxu0 0
    %327 = vmatpush2.bf16.msra.mxu0 0
    %328 = vmatprep.subr.bf16.mxu0 0
    %329 = vmatpush2.bf16.msra.mxu0 0
    %330 = vmatprep.subr.bf16.mxu0 0
    %331 = vmatpush2.bf16.msra.mxu0 0
    %332 = vmatprep.mubr.bf16.mxu0 0
    %333 = vmatmul.mubr.bf16.gmra.mxu0 %v228
    %v334 = vpop.f32.mrf.mxu0
    %v335 = vadd.f32 %v250, %v334
    %v336 = vpop.f32.mrf.mxu0
    %v337 = vpop.f32.mrf.mxu0
    %v338 = vpop.f32.mrf.mxu0
    %339 = vdwg.mxu0
    %vm340 = vcmask 31744
    %341 = vst.msk [vmem:[%s7] sm:$0xff] %vm340, %v335
    // Predicated region
    $region38: #{mlp_forward.1} parent=1 // pred_check
      _
    $region39: #{mlp_forward.1} parent=1 // pred_check_branch
      %343 = sbr.rel (0) target = $region41
    $region40: #{mlp_forward.1} parent=1 // pred_region
      _
    $region41: #{mlp_forward.1} parent=1 // pred_fallthru
      _
    // Predicated region
    $region42: #{mlp_forward.1} parent=1 // pred_check
      _
    $region43: #{mlp_forward.1} parent=1 // pred_check_branch
      %345 = sbr.rel (0) target = $region45
    $region44: #{mlp_forward.1} parent=1 // pred_region
      _
    $region45: #{mlp_forward.1} parent=1 // pred_fallthru
      _
    %346 = vsyncpa [#allocation3], 1
    %347 = vsyncpa [#allocation5], 1

</llo_original>
